<compile_context>
chip_gen: v5e
topology: v5e:2x2
jax: 0.10.0
libtpu: 0.0.40
codegen_flags: <defaults>
</compile_context>

<pallas_src>
import jax
import jax.numpy as jnp
from jax.experimental import pallas as pl
from jax.experimental.pallas import tpu as pltpu

EPS = 1e-5


def _pick_bn(n, per_elem_out_bytes, target_bytes=4 << 20, max_unroll=32):
    """Largest divisor of n (<= max_unroll) whose output block stays <= target."""
    best = 1
    for d in range(1, min(n, max_unroll) + 1):
        if n % d == 0 and d * per_elem_out_bytes <= target_bytes:
            best = d
    return best


def _make_stats_kernel(bn, ks, l_out, c_out):
    """Pass 1: per-block partial sum(y), sum(y^2) of the conv output (no scratch,
    grid is fully parallel; partials are combined in JAX)."""

    def stats_kernel(x_ref, w_ref, psum_ref, psumsq_ref):
        s = jnp.zeros((c_out, 1), jnp.float32)
        ss = jnp.zeros((c_out, 1), jnp.float32)
        for b in range(bn):
            # In-kernel im2col as ks shifted dots: y = sum_k W_k @ x[b,:,k:k+L_out].
            y = jnp.dot(w_ref[0], x_ref[b, :, 0:l_out],
                        preferred_element_type=jnp.float32)
            for k in range(1, ks):
                y = y + jnp.dot(w_ref[k], x_ref[b, :, k:k + l_out],
                                preferred_element_type=jnp.float32)
            s = s + jnp.sum(y, axis=1, keepdims=True)
            ss = ss + jnp.sum(y * y, axis=1, keepdims=True)
        psum_ref[...] = s
        psumsq_ref[...] = ss

    return stats_kernel


def _make_apply_kernel(bn, ks, l_out, c_out):
    """Pass 2: conv -> fused BN scale/shift -> ReLU, stored directly in NCL layout."""

    def apply_kernel(x_ref, w_ref, scale_ref, shift_ref, o_ref):
        scale = scale_ref[...]            # (C_out, 1) f32
        shift = shift_ref[...]            # (C_out, 1) f32
        for b in range(bn):
            y = jnp.dot(w_ref[0], x_ref[b, :, 0:l_out],
                        preferred_element_type=jnp.float32)
            for k in range(1, ks):
                y = y + jnp.dot(w_ref[k], x_ref[b, :, k:k + l_out],
                                preferred_element_type=jnp.float32)
            o_ref[b, :, :] = jnp.maximum(y * scale + shift, 0.0).astype(o_ref.dtype)

    return apply_kernel


def conv1d_block_forward(x, weight, bias, gamma, beta, ks, *,
                         use_bf16=True, out_dtype=jnp.float32):
    """x: (N, C_in, L) f32. weight: (C_out, C_in, ks). Returns (N, C_out, L_out)."""
    del bias  # Exactly cancelled by batch-statistic BatchNorm (training-mode forward).

    N, C_in, L = x.shape
    C_out = weight.shape[0]
    L_out = L - ks + 1
    M = N * L_out
    K = C_in * ks

    in_dtype = jnp.bfloat16 if use_bf16 else jnp.float32
    x_k = x.astype(in_dtype)                                   # (N, C_in, L), lane-dense L
    # w_k[k, o, c] = weight[o, c, k]: one (C_out, C_in) matrix per tap.
    w_k = jnp.transpose(weight, (2, 0, 1)).astype(in_dtype)    # (ks, C_out, C_in)

    out_itemsize = jnp.dtype(out_dtype).itemsize
    bn = _pick_bn(N, C_out * L_out * out_itemsize)             # batch elements per block
    n_blocks = N // bn
    grid = (n_blocks,)

    x_spec = pl.BlockSpec((bn, C_in, L), lambda i: (i, 0, 0))
    w_spec = pl.BlockSpec((ks, C_out, C_in), lambda i: (0, 0, 0))   # grid-invariant
    col_spec = pl.BlockSpec((C_out, 1), lambda i: (0, 0))           # grid-invariant
    part_spec = pl.BlockSpec((None, C_out, 1), lambda i: (i, 0, 0)) # per-block partials

    # VMEM budget from the actual tile footprint (double-buffered x/out blocks,
    # weights, a few per-element f32 temporaries) instead of a flat 32 MiB.
    x_block_bytes = bn * C_in * L * jnp.dtype(in_dtype).itemsize
    out_block_bytes = bn * C_out * L_out * out_itemsize
    w_bytes = w_k.size * w_k.dtype.itemsize
    vmem_need = (2 * (x_block_bytes + out_block_bytes) + 2 * w_bytes
                 + 6 * C_out * max(L_out, 128) * 4 + (2 << 20))
    vmem_limit = int(min(max(vmem_need, 16 << 20), 64 << 20))

    flops = 2 * M * K * C_out
    bytes_x = x_k.size * x_k.dtype.itemsize

    # ---- Pass 1: per-block partial batch statistics of the conv output.
    psum_part, psumsq_part = pl.pallas_call(
        _make_stats_kernel(bn, ks, L_out, C_out),
        out_shape=(jax.ShapeDtypeStruct((n_blocks, C_out, 1), jnp.float32),
                   jax.ShapeDtypeStruct((n_blocks, C_out, 1), jnp.float32)),
        grid=grid,
        in_specs=[x_spec, w_spec],
        out_specs=(part_spec, part_spec),
        compiler_params=pltpu.CompilerParams(
            dimension_semantics=("parallel",),
            vmem_limit_bytes=vmem_limit),
        cost_estimate=pl.CostEstimate(
            flops=flops, transcendentals=0,
            bytes_accessed=bytes_x + w_bytes + 2 * 4 * n_blocks * C_out),
    )(x_k, w_k)

    # ---- Tiny JAX finalize: combine partials, form the fused BN affine.
    sum_y = jnp.sum(psum_part, axis=0)[:, 0]                   # (C_out,)
    sum_ysq = jnp.sum(psumsq_part, axis=0)[:, 0]               # (C_out,)
    mean = sum_y / M
    var = jnp.maximum(sum_ysq / M - mean * mean, 0.0)          # biased batch variance
    scale = gamma.astype(jnp.float32) * jax.lax.rsqrt(var + EPS)
    shift = beta.astype(jnp.float32) - mean * scale
    scale_col = scale.reshape(C_out, 1)
    shift_col = shift.reshape(C_out, 1)

    # ---- Pass 2: conv -> scale/shift -> ReLU, written once in NCL layout.
    out = pl.pallas_call(
        _make_apply_kernel(bn, ks, L_out, C_out),
        out_shape=jax.ShapeDtypeStruct((N, C_out, L_out), out_dtype),
        grid=grid,
        in_specs=[x_spec, w_spec, col_spec, col_spec],
        out_specs=pl.BlockSpec((bn, C_out, L_out), lambda i: (i, 0, 0)),
        compiler_params=pltpu.CompilerParams(
            dimension_semantics=("parallel",),
            vmem_limit_bytes=vmem_limit),
        cost_estimate=pl.CostEstimate(
            flops=flops, transcendentals=0,
            bytes_accessed=bytes_x + w_bytes + 2 * 4 * C_out
            + N * C_out * L_out * out_itemsize),
    )(x_k, w_k, scale_col, shift_col)

    return out


def _reference(x, weight, bias, gamma, beta, ks):
    """Pure-JAX f32 reference of the PyTorch forward (conv -> BN(batch stats) -> ReLU)."""
    L_out = x.shape[2] - ks + 1
    y = None
    for k in range(ks):
        t = jnp.einsum('oc,ncl->nol', weight[:, :, k], x[:, :, k:k + L_out])
        y = t if y is None else y + t
    y = y + bias[None, :, None]
    mean = jnp.mean(y, axis=(0, 2), keepdims=True)
    var = jnp.mean((y - mean) ** 2, axis=(0, 2), keepdims=True)  # biased variance
    out = (y - mean) * jax.lax.rsqrt(var + EPS) * gamma[None, :, None] + beta[None, :, None]
    return jnp.maximum(out, 0.0)


if __name__ == "__main__":
    # Shapes consistent with Conv1DBlock(in_channels=4, ks=3, n_filters=128).
    N, C_in, L = 2, 4, 16
    ks, C_out = 3, 128

    key = jax.random.PRNGKey(0)
    kx, kw, kb = jax.random.split(key, 3)

    x = jax.random.normal(kx, (N, C_in, L), dtype=jnp.float32)
    weight = jax.random.normal(kw, (C_out, C_in, ks), dtype=jnp.float32) * 0.1
    bias = jax.random.normal(kb, (C_out,), dtype=jnp.float32) * 0.1
    gamma = jnp.ones((C_out,), dtype=jnp.float32)    # BatchNorm1d default weight
    beta = jnp.zeros((C_out,), dtype=jnp.float32)    # BatchNorm1d default bias

    out = conv1d_block_forward(x, weight, bias, gamma, beta, ks)
    out = jax.block_until_ready(out)

    assert out.shape == (N, C_out, L - ks + 1)
    assert bool(jnp.all(out >= 0.0))                 # ReLU post-condition

    ref = _reference(x, weight, bias, gamma, beta, ks)
    max_err = float(jnp.max(jnp.abs(out - ref)))
    assert max_err < 0.1, f"max |err| vs f32 reference = {max_err}"

    print("KERNEL_OK")
</pallas_src>

<mosaic_0001>
module attributes {stable_mosaic.version = 11 : i64} {
  func.func @stats_kernel(%arg0: i32, %arg1: memref<2x4x16xbf16, #tpu.memory_space<vmem>>, %arg2: memref<3x128x4xbf16, #tpu.memory_space<vmem>>, %arg3: memref<1x128x1xf32, #tpu.memory_space<vmem>>, %arg4: memref<1x128x1xf32, #tpu.memory_space<vmem>>) attributes {dimension_semantics = [#tpu.dimension_semantics<parallel>], iteration_bounds = array<i64: 1>, scalar_prefetch = 0 : i64, scratch_operands = 0 : i64, tpu.core_type = #tpu.core_type<tc>, window_params = [{transform_indices = @transform_0, window_bounds = array<i64: 2, 4, 16>}, {pipeline_mode = #tpu.pipeline_mode<synchronous>, transform_indices = @transform_1, window_bounds = array<i64: 3, 128, 4>}, {transform_indices = @transform_2, window_bounds = array<i64: 1, 128, 1>}, {transform_indices = @transform_3, window_bounds = array<i64: 1, 128, 1>}]} {
    %cst = arith.constant 0.000000e+00 : f32
    %0 = vector.broadcast %cst : f32 to vector<128x1xf32>
    %cst_0 = arith.constant 0.000000e+00 : f32
    %1 = vector.broadcast %cst_0 : f32 to vector<128x1xf32>
    %c0 = arith.constant 0 : index
    %c0_1 = arith.constant 0 : index
    %c0_2 = arith.constant 0 : index
    %2 = vector.load %arg2[%c0, %c0_1, %c0_2] : memref<3x128x4xbf16, #tpu.memory_space<vmem>>, vector<1x128x4xbf16>
    %3 = vector.shape_cast %2 : vector<1x128x4xbf16> to vector<128x4xbf16>
    %c0_3 = arith.constant 0 : index
    %c0_4 = arith.constant 0 : index
    %c0_5 = arith.constant 0 : index
    %4 = vector.load %arg1[%c0_3, %c0_4, %c0_5] : memref<2x4x16xbf16, #tpu.memory_space<vmem>>, vector<1x4x14xbf16>
    %5 = vector.shape_cast %4 : vector<1x4x14xbf16> to vector<4x14xbf16>
    %cst_6 = arith.constant dense<0.000000e+00> : vector<128x14xf32>
    %6 = tpu.matmul %3, %5, %cst_6 {dimension_numbers = #tpu.dot_dimension_numbers<[1], [0], [0], [1], [0, 0, 1, 1], [], []>} : vector<128x4xbf16>, vector<4x14xbf16>, vector<128x14xf32> -> vector<128x14xf32>
    %c1 = arith.constant 1 : index
    %c0_7 = arith.constant 0 : index
    %c0_8 = arith.constant 0 : index
    %7 = vector.load %arg2[%c1, %c0_7, %c0_8] : memref<3x128x4xbf16, #tpu.memory_space<vmem>>, vector<1x128x4xbf16>
    %8 = vector.shape_cast %7 : vector<1x128x4xbf16> to vector<128x4xbf16>
    %c0_9 = arith.constant 0 : index
    %c0_10 = arith.constant 0 : index
    %c1_11 = arith.constant 1 : index
    %9 = vector.load %arg1[%c0_9, %c0_10, %c1_11] : memref<2x4x16xbf16, #tpu.memory_space<vmem>>, vector<1x4x14xbf16>
    %10 = vector.shape_cast %9 : vector<1x4x14xbf16> to vector<4x14xbf16>
    %cst_12 = arith.constant dense<0.000000e+00> : vector<128x14xf32>
    %11 = tpu.matmul %8, %10, %cst_12 {dimension_numbers = #tpu.dot_dimension_numbers<[1], [0], [0], [1], [0, 0, 1, 1], [], []>} : vector<128x4xbf16>, vector<4x14xbf16>, vector<128x14xf32> -> vector<128x14xf32>
    %12 = arith.addf %6, %11 : vector<128x14xf32>
    %c2 = arith.constant 2 : index
    %c0_13 = arith.constant 0 : index
    %c0_14 = arith.constant 0 : index
    %13 = vector.load %arg2[%c2, %c0_13, %c0_14] : memref<3x128x4xbf16, #tpu.memory_space<vmem>>, vector<1x128x4xbf16>
    %14 = vector.shape_cast %13 : vector<1x128x4xbf16> to vector<128x4xbf16>
    %c0_15 = arith.constant 0 : index
    %c0_16 = arith.constant 0 : index
    %c2_17 = arith.constant 2 : index
    %15 = vector.load %arg1[%c0_15, %c0_16, %c2_17] : memref<2x4x16xbf16, #tpu.memory_space<vmem>>, vector<1x4x14xbf16>
    %16 = vector.shape_cast %15 : vector<1x4x14xbf16> to vector<4x14xbf16>
    %cst_18 = arith.constant dense<0.000000e+00> : vector<128x14xf32>
    %17 = tpu.matmul %14, %16, %cst_18 {dimension_numbers = #tpu.dot_dimension_numbers<[1], [0], [0], [1], [0, 0, 1, 1], [], []>} : vector<128x4xbf16>, vector<4x14xbf16>, vector<128x14xf32> -> vector<128x14xf32>
    %18 = arith.addf %12, %17 : vector<128x14xf32>
    %cst_19 = arith.constant dense<0.000000e+00> : vector<128xf32>
    %19 = vector.multi_reduction <add>, %18, %cst_19 [1] : vector<128x14xf32> to vector<128xf32>
    %20 = vector.shape_cast %19 : vector<128xf32> to vector<128x1xf32>
    %21 = arith.addf %0, %20 : vector<128x1xf32>
    %22 = arith.mulf %18, %18 : vector<128x14xf32>
    %cst_20 = arith.constant dense<0.000000e+00> : vector<128xf32>
    %23 = vector.multi_reduction <add>, %22, %cst_20 [1] : vector<128x14xf32> to vector<128xf32>
    %24 = vector.shape_cast %23 : vector<128xf32> to vector<128x1xf32>
    %25 = arith.addf %1, %24 : vector<128x1xf32>
    %c0_21 = arith.constant 0 : index
    %c0_22 = arith.constant 0 : index
    %c0_23 = arith.constant 0 : index
    %26 = vector.load %arg2[%c0_21, %c0_22, %c0_23] : memref<3x128x4xbf16, #tpu.memory_space<vmem>>, vector<1x128x4xbf16>
    %27 = vector.shape_cast %26 : vector<1x128x4xbf16> to vector<128x4xbf16>
    %c1_24 = arith.constant 1 : index
    %c0_25 = arith.constant 0 : index
    %c0_26 = arith.constant 0 : index
    %28 = vector.load %arg1[%c1_24, %c0_25, %c0_26] : memref<2x4x16xbf16, #tpu.memory_space<vmem>>, vector<1x4x14xbf16>
    %29 = vector.shape_cast %28 : vector<1x4x14xbf16> to vector<4x14xbf16>
    %cst_27 = arith.constant dense<0.000000e+00> : vector<128x14xf32>
    %30 = tpu.matmul %27, %29, %cst_27 {dimension_numbers = #tpu.dot_dimension_numbers<[1], [0], [0], [1], [0, 0, 1, 1], [], []>} : vector<128x4xbf16>, vector<4x14xbf16>, vector<128x14xf32> -> vector<128x14xf32>
    %c1_28 = arith.constant 1 : index
    %c0_29 = arith.constant 0 : index
    %c0_30 = arith.constant 0 : index
    %31 = vector.load %arg2[%c1_28, %c0_29, %c0_30] : memref<3x128x4xbf16, #tpu.memory_space<vmem>>, vector<1x128x4xbf16>
    %32 = vector.shape_cast %31 : vector<1x128x4xbf16> to vector<128x4xbf16>
    %c1_31 = arith.constant 1 : index
    %c0_32 = arith.constant 0 : index
    %c1_33 = arith.constant 1 : index
    %33 = vector.load %arg1[%c1_31, %c0_32, %c1_33] : memref<2x4x16xbf16, #tpu.memory_space<vmem>>, vector<1x4x14xbf16>
    %34 = vector.shape_cast %33 : vector<1x4x14xbf16> to vector<4x14xbf16>
    %cst_34 = arith.constant dense<0.000000e+00> : vector<128x14xf32>
    %35 = tpu.matmul %32, %34, %cst_34 {dimension_numbers = #tpu.dot_dimension_numbers<[1], [0], [0], [1], [0, 0, 1, 1], [], []>} : vector<128x4xbf16>, vector<4x14xbf16>, vector<128x14xf32> -> vector<128x14xf32>
    %36 = arith.addf %30, %35 : vector<128x14xf32>
    %c2_35 = arith.constant 2 : index
    %c0_36 = arith.constant 0 : index
    %c0_37 = arith.constant 0 : index
    %37 = vector.load %arg2[%c2_35, %c0_36, %c0_37] : memref<3x128x4xbf16, #tpu.memory_space<vmem>>, vector<1x128x4xbf16>
    %38 = vector.shape_cast %37 : vector<1x128x4xbf16> to vector<128x4xbf16>
    %c1_38 = arith.constant 1 : index
    %c0_39 = arith.constant 0 : index
    %c2_40 = arith.constant 2 : index
    %39 = vector.load %arg1[%c1_38, %c0_39, %c2_40] : memref<2x4x16xbf16, #tpu.memory_space<vmem>>, vector<1x4x14xbf16>
    %40 = vector.shape_cast %39 : vector<1x4x14xbf16> to vector<4x14xbf16>
    %cst_41 = arith.constant dense<0.000000e+00> : vector<128x14xf32>
    %41 = tpu.matmul %38, %40, %cst_41 {dimension_numbers = #tpu.dot_dimension_numbers<[1], [0], [0], [1], [0, 0, 1, 1], [], []>} : vector<128x4xbf16>, vector<4x14xbf16>, vector<128x14xf32> -> vector<128x14xf32>
    %42 = arith.addf %36, %41 : vector<128x14xf32>
    %cst_42 = arith.constant dense<0.000000e+00> : vector<128xf32>
    %43 = vector.multi_reduction <add>, %42, %cst_42 [1] : vector<128x14xf32> to vector<128xf32>
    %44 = vector.shape_cast %43 : vector<128xf32> to vector<128x1xf32>
    %45 = arith.addf %21, %44 : vector<128x1xf32>
    %46 = arith.mulf %42, %42 : vector<128x14xf32>
    %cst_43 = arith.constant dense<0.000000e+00> : vector<128xf32>
    %47 = vector.multi_reduction <add>, %46, %cst_43 [1] : vector<128x14xf32> to vector<128xf32>
    %48 = vector.shape_cast %47 : vector<128xf32> to vector<128x1xf32>
    %49 = arith.addf %25, %48 : vector<128x1xf32>
    %c0_44 = arith.constant 0 : index
    %c0_45 = arith.constant 0 : index
    %c0_46 = arith.constant 0 : index
    %50 = vector.load %arg3[%c0_44, %c0_45, %c0_46] : memref<1x128x1xf32, #tpu.memory_space<vmem>>, vector<1x128x1xf32>
    %51 = vector.shape_cast %50 : vector<1x128x1xf32> to vector<128x1xf32>
    %52 = vector.shape_cast %45 : vector<128x1xf32> to vector<1x128x1xf32>
    tpu.vector_store %arg3[%c0_44, %c0_45, %c0_46], %52 {strides = array<i32>} : memref<1x128x1xf32, #tpu.memory_space<vmem>>, vector<1x128x1xf32>,
    %c0_47 = arith.constant 0 : index
    %c0_48 = arith.constant 0 : index
    %c0_49 = arith.constant 0 : index
    %53 = vector.load %arg4[%c0_47, %c0_48, %c0_49] : memref<1x128x1xf32, #tpu.memory_space<vmem>>, vector<1x128x1xf32>
    %54 = vector.shape_cast %53 : vector<1x128x1xf32> to vector<128x1xf32>
    %55 = vector.shape_cast %49 : vector<128x1xf32> to vector<1x128x1xf32>
    tpu.vector_store %arg4[%c0_47, %c0_48, %c0_49], %55 {strides = array<i32>} : memref<1x128x1xf32, #tpu.memory_space<vmem>>, vector<1x128x1xf32>,
    return
  }
  func.func @transform_0(%arg0: i32) -> (i32, i32, i32) {
    %c0_i32 = arith.constant 0 : i32
    %c0_i32_0 = arith.constant 0 : i32
    %c0_i32_1 = arith.constant 0 : i32
    return %arg0, %c0_i32, %c0_i32_0 : i32, i32, i32
  }
  func.func @transform_1(%arg0: i32) -> (i32, i32, i32) {
    %c0_i32 = arith.constant 0 : i32
    %c0_i32_0 = arith.constant 0 : i32
    %c0_i32_1 = arith.constant 0 : i32
    %c0_i32_2 = arith.constant 0 : i32
    return %c0_i32, %c0_i32_0, %c0_i32_1 : i32, i32, i32
  }
  func.func @transform_2(%arg0: i32) -> (i32, i32, i32) {
    %c0_i32 = arith.constant 0 : i32
    %c0_i32_0 = arith.constant 0 : i32
    %c0_i32_1 = arith.constant 0 : i32
    return %arg0, %c0_i32, %c0_i32_0 : i32, i32, i32
  }
  func.func @transform_3(%arg0: i32) -> (i32, i32, i32) {
    %c0_i32 = arith.constant 0 : i32
    %c0_i32_0 = arith.constant 0 : i32
    %c0_i32_1 = arith.constant 0 : i32
    return %arg0, %c0_i32, %c0_i32_0 : i32, i32, i32
  }
}

</mosaic_0001>

<llo_original>
// kernel: tpu_custom_call.1
$region0: #{tpu_custom_call.1}
  #allocation0 [shape = 'u32[]', space=smem, size = 0x4, offset = 0x4, fixed_abs, tag = 'smem constant byte address 0x4 - core index']
  #allocation1 [shape = 'u32[72,128]{1,0:T(1,128)}', space=vmem, size = 0x9000, scoped, tag = 'internal scratch']
  %s0 = inlined_call_operand.vmem [shape: bf16[2,4,16], index: 0, kind: input, shape index: {}]
  %s1 = inlined_call_operand.vmem [shape: bf16[3,128,4], index: 1, kind: input, shape index: {}]
  %s2 = inlined_call_operand.vmem [shape: f32[1,128,1], index: 2, kind: output, shape index: {0}]
  %s3 = inlined_call_operand.vmem [shape: f32[1,128,1], index: 3, kind: output, shape index: {1}]
  %4 = xla_tuple %s2, %s3
  %s5 = sld [smem:[#allocation0]]
  $region26: #{tpu_custom_call.1} parent=0
    _
  %s7 = ssub.s32 1, %s5
  %s8 = scalar_select 0, %s7, %s5
  // Predicated region
  $region2: #{tpu_custom_call.1} parent=0 // pred_check
    _
  $region3: #{tpu_custom_call.1} parent=0 // pred_check_branch
    %10 = sbr.rel (0) target = $region5
  $region4: #{tpu_custom_call.1} parent=0 // pred_region
    _
  $region5: #{tpu_custom_call.1} parent=0 // pred_fallthru
    _
  // Predicated region
  $region6: #{tpu_custom_call.1} parent=0 // pred_check
    _
  $region7: #{tpu_custom_call.1} parent=0 // pred_check_branch
    %12 = sbr.rel (0) target = $region9
  $region8: #{tpu_custom_call.1} parent=0 // pred_region
    _
  $region9: #{tpu_custom_call.1} parent=0 // pred_fallthru
    _
  %v14 = vld [vmem:[%s1] sm:$0xf]
  %v15 = vld [vmem:[%s1 + $0x4] sm:$0xf]
  %v16 = vld [vmem:[%s1 + $0x8] sm:$0xf]
  %v17 = vld [vmem:[%s1 + $0xc] sm:$0xf]
  %v18 = vld [vmem:[%s1 + $0x10] sm:$0xf]
  %v19 = vld [vmem:[%s1 + $0x14] sm:$0xf]
  %v20 = vld [vmem:[%s1 + $0x18] sm:$0xf]
  %v21 = vld [vmem:[%s1 + $0x1c] sm:$0xf]
  %v22 = vld [vmem:[%s1 + $0x20] sm:$0xf]
  %v23 = vld [vmem:[%s1 + $0x24] sm:$0xf]
  %v24 = vld [vmem:[%s1 + $0x28] sm:$0xf]
  %v25 = vld [vmem:[%s1 + $0x2c] sm:$0xf]
  %v26 = vld [vmem:[%s1 + $0x30] sm:$0xf]
  %v27 = vld [vmem:[%s1 + $0x34] sm:$0xf]
  %v28 = vld [vmem:[%s1 + $0x38] sm:$0xf]
  %v29 = vld [vmem:[%s1 + $0x3c] sm:$0xf]
  %v30 = vld [vmem:[%s0] sm:$0x3]
  %s31 = scalar_lea.vmem %s1, 64
  %v32 = vld [vmem:[%s31] sm:$0xf]
  %v33 = vld [vmem:[%s31 + $0x4] sm:$0xf]
  %v34 = vld [vmem:[%s31 + $0x8] sm:$0xf]
  %v35 = vld [vmem:[%s31 + $0xc] sm:$0xf]
  %v36 = vld [vmem:[%s31 + $0x10] sm:$0xf]
  %v37 = vld [vmem:[%s31 + $0x14] sm:$0xf]
  %v38 = vld [vmem:[%s31 + $0x18] sm:$0xf]
  %v39 = vld [vmem:[%s31 + $0x1c] sm:$0xf]
  %v40 = vld [vmem:[%s31 + $0x20] sm:$0xf]
  %v41 = vld [vmem:[%s31 + $0x24] sm:$0xf]
  %v42 = vld [vmem:[%s31 + $0x28] sm:$0xf]
  %v43 = vld [vmem:[%s31 + $0x2c] sm:$0xf]
  %v44 = vld [vmem:[%s31 + $0x30] sm:$0xf]
  %v45 = vld [vmem:[%s31 + $0x34] sm:$0xf]
  %v46 = vld [vmem:[%s31 + $0x38] sm:$0xf]
  %v47 = vld [vmem:[%s31 + $0x3c] sm:$0xf]
  %v64 = vunpack.c.l.b16 %v32
  %v65 = vunpack.c.l.b16 %v33
  %v66 = vunpack.c.l.b16 %v34
  %v67 = vunpack.c.l.b16 %v35
  %v68 = vunpack.c.l.b16 %v36
  %v69 = vunpack.c.l.b16 %v37
  %v70 = vunpack.c.l.b16 %v38
  %v71 = vunpack.c.l.b16 %v39
  %v72 = vunpack.c.l.b16 %v40
  %v73 = vunpack.c.l.b16 %v41
  %v74 = vunpack.c.l.b16 %v42
  %v75 = vunpack.c.l.b16 %v43
  %v76 = vunpack.c.l.b16 %v44
  %v77 = vunpack.c.l.b16 %v45
  %v78 = vunpack.c.l.b16 %v46
  %v79 = vunpack.c.l.b16 %v47
  %v80 = vpack.c.b16 %v65, %v64
  %v81 = vpack.c.b16 %v67, %v66
  %v82 = vpack.c.b16 %v69, %v68
  %v83 = vpack.c.b16 %v71, %v70
  %v84 = vpack.c.b16 %v73, %v72
  %v85 = vpack.c.b16 %v75, %v74
  %v86 = vpack.c.b16 %v77, %v76
  %v87 = vpack.c.b16 %v79, %v78
  %89 = vst [vmem:[#allocation1] ss:$4 sm:$0xff] %v30
  %v90 = vld.sshfl [vmem:[#allocation1] sm:$0xff pattern:$0x73625140]
  %92 = vrot.lane.b32.xlu0 %v90, 127
  %v93 = vpop.permute.xlu0 %92
  %vm94 = vcmask 31744
  %v96 = vsel %vm94, %v80, 0
  %v99 = vsel %vm94, %v81, 0
  %v102 = vsel %vm94, %v82, 0
  %v105 = vsel %vm94, %v83, 0
  %v108 = vsel %vm94, %v84, 0
  %v111 = vsel %vm94, %v85, 0
  %v114 = vsel %vm94, %v86, 0
  %v117 = vsel %vm94, %v87, 0
  %vm119 = vcmask 1041408
  %v121 = vsel %vm119, %v93, 0
  %123 = vmatpush.bf16.msra.mxu0 0
  %124 = vmatpush.bf16.msra.mxu0 0
  %125 = vmatpush.bf16.msra.mxu0 0
  %126 = vmatpush.bf16.msra.mxu0 0
  %127 = vmatpush.bf16.msra.mxu0 0
  %128 = vmatpush.bf16.msra.mxu0 0
  %129 = vmatpush.bf16.msra.mxu0 0
  %130 = vmatpush.bf16.msra.mxu0 %v121
  %131 = vmatmul.bf16.gmra.mxu0 %v96
  %v132 = vpop.f32.mrf.mxu0
  %v133 = vadd.f32 0.0, %v132
  %v134 = vpop.f32.mrf.mxu0
  %v135 = vadd.f32 0.0, %v134
  %136 = vmatmul.bf16.gmra.mxu0 %v99
  %v137 = vpop.f32.mrf.mxu0
  %v138 = vadd.f32 0.0, %v137
  %v139 = vpop.f32.mrf.mxu0
  %v140 = vadd.f32 0.0, %v139
  %141 = vmatmul.bf16.gmra.mxu0 %v102
  %v142 = vpop.f32.mrf.mxu0
  %v143 = vadd.f32 0.0, %v142
  %v144 = vpop.f32.mrf.mxu0
  %v145 = vadd.f32 0.0, %v144
  %146 = vmatmul.bf16.gmra.mxu0 %v105
  %v147 = vpop.f32.mrf.mxu0
  %v148 = vadd.f32 0.0, %v147
  %v149 = vpop.f32.mrf.mxu0
  %v150 = vadd.f32 0.0, %v149
  %151 = vmatmul.bf16.gmra.mxu0 %v108
  %v152 = vpop.f32.mrf.mxu0
  %v153 = vadd.f32 0.0, %v152
  %v154 = vpop.f32.mrf.mxu0
  %v155 = vadd.f32 0.0, %v154
  %156 = vmatmul.bf16.gmra.mxu0 %v111
  %v157 = vpop.f32.mrf.mxu0
  %v158 = vadd.f32 0.0, %v157
  %v159 = vpop.f32.mrf.mxu0
  %v160 = vadd.f32 0.0, %v159
  %161 = vmatmul.bf16.gmra.mxu0 %v114
  %v162 = vpop.f32.mrf.mxu0
  %v163 = vadd.f32 0.0, %v162
  %v164 = vpop.f32.mrf.mxu0
  %v165 = vadd.f32 0.0, %v164
  %166 = vmatmul.bf16.gmra.mxu0 %v117
  %v167 = vpop.f32.mrf.mxu0
  %v168 = vadd.f32 0.0, %v167
  %v169 = vpop.f32.mrf.mxu0
  %v170 = vadd.f32 0.0, %v169
  %171 = vdwg.mxu0
  %v188 = vunpack.c.l.b16 %v14
  %v189 = vunpack.c.l.b16 %v15
  %v190 = vunpack.c.l.b16 %v16
  %v191 = vunpack.c.l.b16 %v17
  %v192 = vunpack.c.l.b16 %v18
  %v193 = vunpack.c.l.b16 %v19
  %v194 = vunpack.c.l.b16 %v20
  %v195 = vunpack.c.l.b16 %v21
  %v196 = vunpack.c.l.b16 %v22
  %v197 = vunpack.c.l.b16 %v23
  %v198 = vunpack.c.l.b16 %v24
  %v199 = vunpack.c.l.b16 %v25
  %v200 = vunpack.c.l.b16 %v26
  %v201 = vunpack.c.l.b16 %v27
  %v202 = vunpack.c.l.b16 %v28
  %v203 = vunpack.c.l.b16 %v29
  %v204 = vpack.c.b16 %v189, %v188
  %v205 = vpack.c.b16 %v191, %v190
  %v206 = vpack.c.b16 %v193, %v192
  %v207 = vpack.c.b16 %v195, %v194
  %v208 = vpack.c.b16 %v197, %v196
  %v209 = vpack.c.b16 %v199, %v198
  %v210 = vpack.c.b16 %v201, %v200
  %v211 = vpack.c.b16 %v203, %v202
  %v213 = vsel %vm94, %v204, 0
  %v216 = vsel %vm94, %v205, 0
  %v219 = vsel %vm94, %v206, 0
  %v222 = vsel %vm94, %v207, 0
  %v225 = vsel %vm94, %v208, 0
  %v228 = vsel %vm94, %v209, 0
  %v231 = vsel %vm94, %v210, 0
  %v234 = vsel %vm94, %v211, 0
  %v236 = vsel %vm119, %v30, 0
  %238 = vmatpush.bf16.msra.mxu0 0
  %239 = vmatpush.bf16.msra.mxu0 0
  %240 = vmatpush.bf16.msra.mxu0 0
  %241 = vmatpush.bf16.msra.mxu0 0
  %242 = vmatpush.bf16.msra.mxu0 0
  %243 = vmatpush.bf16.msra.mxu0 0
  %244 = vmatpush.bf16.msra.mxu0 0
  %245 = vmatpush.bf16.msra.mxu0 %v236
  %246 = vmatmul.bf16.gmra.mxu0 %v213
  %v247 = vpop.f32.mrf.mxu0
  %v248 = vadd.f32 %v133, %v247
  %v249 = vpop.f32.mrf.mxu0
  %v250 = vadd.f32 %v135, %v249
  %251 = vmatmul.bf16.gmra.mxu0 %v216
  %v252 = vpop.f32.mrf.mxu0
  %v253 = vadd.f32 %v138, %v252
  %v254 = vpop.f32.mrf.mxu0
  %v255 = vadd.f32 %v140, %v254
  %256 = vmatmul.bf16.gmra.mxu0 %v219
  %v257 = vpop.f32.mrf.mxu0
  %v258 = vadd.f32 %v143, %v257
  %v259 = vpop.f32.mrf.mxu0
  %v260 = vadd.f32 %v145, %v259
  %261 = vmatmul.bf16.gmra.mxu0 %v222
  %v262 = vpop.f32.mrf.mxu0
  %v263 = vadd.f32 %v148, %v262
  %v264 = vpop.f32.mrf.mxu0
  %v265 = vadd.f32 %v150, %v264
  %266 = vmatmul.bf16.gmra.mxu0 %v225
  %v267 = vpop.f32.mrf.mxu0
  %v268 = vadd.f32 %v153, %v267
  %v269 = vpop.f32.mrf.mxu0
  %v270 = vadd.f32 %v155, %v269
  %271 = vmatmul.bf16.gmra.mxu0 %v228
  %v272 = vpop.f32.mrf.mxu0
  %v273 = vadd.f32 %v158, %v272
  %v274 = vpop.f32.mrf.mxu0
  %v275 = vadd.f32 %v160, %v274
  %276 = vmatmul.bf16.gmra.mxu0 %v231
  %v277 = vpop.f32.mrf.mxu0
  %v278 = vadd.f32 %v163, %v277
  %v279 = vpop.f32.mrf.mxu0
  %v280 = vadd.f32 %v165, %v279
  %281 = vmatmul.bf16.gmra.mxu0 %v234
  %v282 = vpop.f32.mrf.mxu0
  %v283 = vadd.f32 %v168, %v282
  %v284 = vpop.f32.mrf.mxu0
  %v285 = vadd.f32 %v170, %v284
  %286 = vdwg.mxu0
  %s287 = scalar_lea.vmem %s1, 128
  %v288 = vld [vmem:[%s287] sm:$0xf]
  %v289 = vld [vmem:[%s287 + $0x4] sm:$0xf]
  %v290 = vld [vmem:[%s287 + $0x8] sm:$0xf]
  %v291 = vld [vmem:[%s287 + $0xc] sm:$0xf]
  %v292 = vld [vmem:[%s287 + $0x10] sm:$0xf]
  %v293 = vld [vmem:[%s287 + $0x14] sm:$0xf]
  %v294 = vld [vmem:[%s287 + $0x18] sm:$0xf]
  %v295 = vld [vmem:[%s287 + $0x1c] sm:$0xf]
  %v296 = vld [vmem:[%s287 + $0x20] sm:$0xf]
  %v297 = vld [vmem:[%s287 + $0x24] sm:$0xf]
  %v298 = vld [vmem:[%s287 + $0x28] sm:$0xf]
  %v299 = vld [vmem:[%s287 + $0x2c] sm:$0xf]
  %v300 = vld [vmem:[%s287 + $0x30] sm:$0xf]
  %v301 = vld [vmem:[%s287 + $0x34] sm:$0xf]
  %v302 = vld [vmem:[%s287 + $0x38] sm:$0xf]
  %v303 = vld [vmem:[%s287 + $0x3c] sm:$0xf]
  %v304 = vld [vmem:[%s0] sm:$0x3]
  %v321 = vunpack.c.l.b16 %v288
  %v322 = vunpack.c.l.b16 %v289
  %v323 = vunpack.c.l.b16 %v290
  %v324 = vunpack.c.l.b16 %v291
  %v325 = vunpack.c.l.b16 %v292
  %v326 = vunpack.c.l.b16 %v293
  %v327 = vunpack.c.l.b16 %v294
  %v328 = vunpack.c.l.b16 %v295
  %v329 = vunpack.c.l.b16 %v296
  %v330 = vunpack.c.l.b16 %v297
  %v331 = vunpack.c.l.b16 %v298
  %v332 = vunpack.c.l.b16 %v299
  %v333 = vunpack.c.l.b16 %v300
  %v334 = vunpack.c.l.b16 %v301
  %v335 = vunpack.c.l.b16 %v302
  %v336 = vunpack.c.l.b16 %v303
  %v337 = vpack.c.b16 %v322, %v321
  %v338 = vpack.c.b16 %v324, %v323
  %v339 = vpack.c.b16 %v326, %v325
  %v340 = vpack.c.b16 %v328, %v327
  %v341 = vpack.c.b16 %v330, %v329
  %v342 = vpack.c.b16 %v332, %v331
  %v343 = vpack.c.b16 %v334, %v333
  %v344 = vpack.c.b16 %v336, %v335
  %346 = vst [vmem:[#allocation1] ss:$4 sm:$0xff] %v304
  %v347 = vld.sshfl [vmem:[#allocation1] sm:$0xff pattern:$0x73625140]
  %349 = vrot.lane.b32.xlu0 %v347, 126
  %v350 = vpop.permute.xlu0 %349
  %v352 = vsel %vm94, %v337, 0
  %v355 = vsel %vm94, %v338, 0
  %v358 = vsel %vm94, %v339, 0
  %v361 = vsel %vm94, %v340, 0
  %v364 = vsel %vm94, %v341, 0
  %v367 = vsel %vm94, %v342, 0
  %v370 = vsel %vm94, %v343, 0
  %v373 = vsel %vm94, %v344, 0
  %v376 = vsel %vm119, %v350, 0
  %378 = vmatpush.bf16.msra.mxu0 0
  %379 = vmatpush.bf16.msra.mxu0 0
  %380 = vmatpush.bf16.msra.mxu0 0
  %381 = vmatpush.bf16.msra.mxu0 0
  %382 = vmatpush.bf16.msra.mxu0 0
  %383 = vmatpush.bf16.msra.mxu0 0
  %384 = vmatpush.bf16.msra.mxu0 0
  %385 = vmatpush.bf16.msra.mxu0 %v376
  %386 = vmatmul.bf16.gmra.mxu0 %v352
  %v387 = vpop.f32.mrf.mxu0
  %v388 = vadd.f32 0.0, %v387
  %v389 = vpop.f32.mrf.mxu0
  %v390 = vadd.f32 0.0, %v389
  %391 = vmatmul.bf16.gmra.mxu0 %v355
  %v392 = vpop.f32.mrf.mxu0
  %v393 = vadd.f32 0.0, %v392
  %v394 = vpop.f32.mrf.mxu0
  %v395 = vadd.f32 0.0, %v394
  %396 = vmatmul.bf16.gmra.mxu0 %v358
  %v397 = vpop.f32.mrf.mxu0
  %v398 = vadd.f32 0.0, %v397
  %v399 = vpop.f32.mrf.mxu0
  %v400 = vadd.f32 0.0, %v399
  %401 = vmatmul.bf16.gmra.mxu0 %v361
  %v402 = vpop.f32.mrf.mxu0
  %v403 = vadd.f32 0.0, %v402
  %v404 = vpop.f32.mrf.mxu0
  %v405 = vadd.f32 0.0, %v404
  %406 = vmatmul.bf16.gmra.mxu0 %v364
  %v407 = vpop.f32.mrf.mxu0
  %v408 = vadd.f32 0.0, %v407
  %v409 = vpop.f32.mrf.mxu0
  %v410 = vadd.f32 0.0, %v409
  %411 = vmatmul.bf16.gmra.mxu0 %v367
  %v412 = vpop.f32.mrf.mxu0
  %v413 = vadd.f32 0.0, %v412
  %v414 = vpop.f32.mrf.mxu0
  %v415 = vadd.f32 0.0, %v414
  %416 = vmatmul.bf16.gmra.mxu0 %v370
  %v417 = vpop.f32.mrf.mxu0
  %v418 = vadd.f32 0.0, %v417
  %v419 = vpop.f32.mrf.mxu0
  %v420 = vadd.f32 0.0, %v419
  %421 = vmatmul.bf16.gmra.mxu0 %v373
  %v422 = vpop.f32.mrf.mxu0
  %v423 = vadd.f32 0.0, %v422
  %v424 = vpop.f32.mrf.mxu0
  %v425 = vadd.f32 0.0, %v424
  %426 = vdwg.mxu0
  %v427 = vadd.f32 %v248, %v388
  %v428 = vadd.f32 %v250, %v390
  %v429 = vadd.f32 %v253, %v393
  %v430 = vadd.f32 %v255, %v395
  %v431 = vadd.f32 %v258, %v398
  %v432 = vadd.f32 %v260, %v400
  %v433 = vadd.f32 %v263, %v403
  %v434 = vadd.f32 %v265, %v405
  %v435 = vadd.f32 %v268, %v408
  %v436 = vadd.f32 %v270, %v410
  %v437 = vadd.f32 %v273, %v413
  %v438 = vadd.f32 %v275, %v415
  %v439 = vadd.f32 %v278, %v418
  %v440 = vadd.f32 %v280, %v420
  %v441 = vadd.f32 %v283, %v423
  %v442 = vadd.f32 %v285, %v425
  %vm443 = vcmask 113664
  %v444 = vsel %vm443, %v427, 0.0
  %445 = vadd.xlane.f32.xlu0 %v444
  %v446 = vpop.xlane.xlu0 %445
  %v447 = vsel %vm443, %v428, 0.0
  %448 = vadd.xlane.f32.xlu0 %v447
  %v449 = vpop.xlane.xlu0 %448
  %v450 = vsel %vm443, %v429, 0.0
  %451 = vadd.xlane.f32.xlu0 %v450
  %v452 = vpop.xlane.xlu0 %451
  %v453 = vsel %vm443, %v430, 0.0
  %454 = vadd.xlane.f32.xlu0 %v453
  %v455 = vpop.xlane.xlu0 %454
  %v456 = vsel %vm443, %v431, 0.0
  %457 = vadd.xlane.f32.xlu0 %v456
  %v458 = vpop.xlane.xlu0 %457
  %v459 = vsel %vm443, %v432, 0.0
  %460 = vadd.xlane.f32.xlu0 %v459
  %v461 = vpop.xlane.xlu0 %460
  %v462 = vsel %vm443, %v433, 0.0
  %463 = vadd.xlane.f32.xlu0 %v462
  %v464 = vpop.xlane.xlu0 %463
  %v465 = vsel %vm443, %v434, 0.0
  %466 = vadd.xlane.f32.xlu0 %v465
  %v467 = vpop.xlane.xlu0 %466
  %v468 = vsel %vm443, %v435, 0.0
  %469 = vadd.xlane.f32.xlu0 %v468
  %v470 = vpop.xlane.xlu0 %469
  %v471 = vsel %vm443, %v436, 0.0
  %472 = vadd.xlane.f32.xlu0 %v471
  %v473 = vpop.xlane.xlu0 %472
  %v474 = vsel %vm443, %v437, 0.0
  %475 = vadd.xlane.f32.xlu0 %v474
  %v476 = vpop.xlane.xlu0 %475
  %v477 = vsel %vm443, %v438, 0.0
  %478 = vadd.xlane.f32.xlu0 %v477
  %v479 = vpop.xlane.xlu0 %478
  %v480 = vsel %vm443, %v439, 0.0
  %481 = vadd.xlane.f32.xlu0 %v480
  %v482 = vpop.xlane.xlu0 %481
  %v483 = vsel %vm443, %v440, 0.0
  %484 = vadd.xlane.f32.xlu0 %v483
  %v485 = vpop.xlane.xlu0 %484
  %v486 = vsel %vm443, %v441, 0.0
  %487 = vadd.xlane.f32.xlu0 %v486
  %v488 = vpop.xlane.xlu0 %487
  %v489 = vsel %vm443, %v442, 0.0
  %490 = vadd.xlane.f32.xlu0 %v489
  %v491 = vpop.xlane.xlu0 %490
  %v492 = vadd.f32 %v446, 0.0
  %v493 = vadd.f32 %v449, 0.0
  %v494 = vadd.f32 %v452, 0.0
  %v495 = vadd.f32 %v455, 0.0
  %v496 = vadd.f32 %v458, 0.0
  %v497 = vadd.f32 %v461, 0.0
  %v498 = vadd.f32 %v464, 0.0
  %v499 = vadd.f32 %v467, 0.0
  %v500 = vadd.f32 %v470, 0.0
  %v501 = vadd.f32 %v473, 0.0
  %v502 = vadd.f32 %v476, 0.0
  %v503 = vadd.f32 %v479, 0.0
  %v504 = vadd.f32 %v482, 0.0
  %v505 = vadd.f32 %v485, 0.0
  %v506 = vadd.f32 %v488, 0.0
  %v507 = vadd.f32 %v491, 0.0
  %v508 = vmul.f32 %v427, %v427
  %v509 = vmul.f32 %v428, %v428
  %v510 = vmul.f32 %v429, %v429
  %v511 = vmul.f32 %v430, %v430
  %v512 = vmul.f32 %v431, %v431
  %v513 = vmul.f32 %v432, %v432
  %v514 = vmul.f32 %v433, %v433
  %v515 = vmul.f32 %v434, %v434
  %v516 = vmul.f32 %v435, %v435
  %v517 = vmul.f32 %v436, %v436
  %v518 = vmul.f32 %v437, %v437
  %v519 = vmul.f32 %v438, %v438
  %v520 = vmul.f32 %v439, %v439
  %v521 = vmul.f32 %v440, %v440
  %v522 = vmul.f32 %v441, %v441
  %v523 = vmul.f32 %v442, %v442
  %v524 = vsel %vm443, %v508, 0.0
  %525 = vadd.xlane.f32.xlu0 %v524
  %v526 = vpop.xlane.xlu0 %525
  %v527 = vsel %vm443, %v509, 0.0
  %528 = vadd.xlane.f32.xlu0 %v527
  %v529 = vpop.xlane.xlu0 %528
  %v530 = vsel %vm443, %v510, 0.0
  %531 = vadd.xlane.f32.xlu0 %v530
  %v532 = vpop.xlane.xlu0 %531
  %v533 = vsel %vm443, %v511, 0.0
  %534 = vadd.xlane.f32.xlu0 %v533
  %v535 = vpop.xlane.xlu0 %534
  %v536 = vsel %vm443, %v512, 0.0
  %537 = vadd.xlane.f32.xlu0 %v536
  %v538 = vpop.xlane.xlu0 %537
  %v539 = vsel %vm443, %v513, 0.0
  %540 = vadd.xlane.f32.xlu0 %v539
  %v541 = vpop.xlane.xlu0 %540
  %v542 = vsel %vm443, %v514, 0.0
  %543 = vadd.xlane.f32.xlu0 %v542
  %v544 = vpop.xlane.xlu0 %543
  %v545 = vsel %vm443, %v515, 0.0
  %546 = vadd.xlane.f32.xlu0 %v545
  %v547 = vpop.xlane.xlu0 %546
  %v548 = vsel %vm443, %v516, 0.0
  %549 = vadd.xlane.f32.xlu0 %v548
  %v550 = vpop.xlane.xlu0 %549
  %v551 = vsel %vm443, %v517, 0.0
  %552 = vadd.xlane.f32.xlu0 %v551
  %v553 = vpop.xlane.xlu0 %552
  %v554 = vsel %vm443, %v518, 0.0
  %555 = vadd.xlane.f32.xlu0 %v554
  %v556 = vpop.xlane.xlu0 %555
  %v557 = vsel %vm443, %v519, 0.0
  %558 = vadd.xlane.f32.xlu0 %v557
  %v559 = vpop.xlane.xlu0 %558
  %v560 = vsel %vm443, %v520, 0.0
  %561 = vadd.xlane.f32.xlu0 %v560
  %v562 = vpop.xlane.xlu0 %561
  %v563 = vsel %vm443, %v521, 0.0
  %564 = vadd.xlane.f32.xlu0 %v563
  %v565 = vpop.xlane.xlu0 %564
  %v566 = vsel %vm443, %v522, 0.0
  %567 = vadd.xlane.f32.xlu0 %v566
  %v568 = vpop.xlane.xlu0 %567
  %v569 = vsel %vm443, %v523, 0.0
  %570 = vadd.xlane.f32.xlu0 %v569
  %v571 = vpop.xlane.xlu0 %570
  %v572 = vadd.f32 %v526, 0.0
  %v573 = vadd.f32 %v529, 0.0
  %v574 = vadd.f32 %v532, 0.0
  %v575 = vadd.f32 %v535, 0.0
  %v576 = vadd.f32 %v538, 0.0
  %v577 = vadd.f32 %v541, 0.0
  %v578 = vadd.f32 %v544, 0.0
  %v579 = vadd.f32 %v547, 0.0
  %v580 = vadd.f32 %v550, 0.0
  %v581 = vadd.f32 %v553, 0.0
  %v582 = vadd.f32 %v556, 0.0
  %v583 = vadd.f32 %v559, 0.0
  %v584 = vadd.f32 %v562, 0.0
  %v585 = vadd.f32 %v565, 0.0
  %v586 = vadd.f32 %v568, 0.0
  %v587 = vadd.f32 %v571, 0.0
  %s588 = scalar_lea.vmem %s0, 2
  %v589 = vld [vmem:[%s588] sm:$0x3]
  %591 = vst [vmem:[#allocation1] ss:$4 sm:$0xff] %v589
  %v592 = vld.sshfl [vmem:[#allocation1] sm:$0xff pattern:$0x73625140]
  %594 = vrot.lane.b32.xlu0 %v592, 127
  %v595 = vpop.permute.xlu0 %594
  %v597 = vsel %vm119, %v595, 0
  %599 = vmatpush.bf16.msra.mxu0 0
  %600 = vmatpush.bf16.msra.mxu0 0
  %601 = vmatpush.bf16.msra.mxu0 0
  %602 = vmatpush.bf16.msra.mxu0 0
  %603 = vmatpush.bf16.msra.mxu0 0
  %604 = vmatpush.bf16.msra.mxu0 0
  %605 = vmatpush.bf16.msra.mxu0 0
  %606 = vmatpush.bf16.msra.mxu0 %v597
  %607 = vmatmul.bf16.gmra.mxu0 %v96
  %v608 = vpop.f32.mrf.mxu0
  %v609 = vadd.f32 0.0, %v608
  %v610 = vpop.f32.mrf.mxu0
  %v611 = vadd.f32 0.0, %v610
  %612 = vmatmul.bf16.gmra.mxu0 %v99
  %v613 = vpop.f32.mrf.mxu0
  %v614 = vadd.f32 0.0, %v613
  %v615 = vpop.f32.mrf.mxu0
  %v616 = vadd.f32 0.0, %v615
  %617 = vmatmul.bf16.gmra.mxu0 %v102
  %v618 = vpop.f32.mrf.mxu0
  %v619 = vadd.f32 0.0, %v618
  %v620 = vpop.f32.mrf.mxu0
  %v621 = vadd.f32 0.0, %v620
  %622 = vmatmul.bf16.gmra.mxu0 %v105
  %v623 = vpop.f32.mrf.mxu0
  %v624 = vadd.f32 0.0, %v623
  %v625 = vpop.f32.mrf.mxu0
  %v626 = vadd.f32 0.0, %v625
  %627 = vmatmul.bf16.gmra.mxu0 %v108
  %v628 = vpop.f32.mrf.mxu0
  %v629 = vadd.f32 0.0, %v628
  %v630 = vpop.f32.mrf.mxu0
  %v631 = vadd.f32 0.0, %v630
  %632 = vmatmul.bf16.gmra.mxu0 %v111
  %v633 = vpop.f32.mrf.mxu0
  %v634 = vadd.f32 0.0, %v633
  %v635 = vpop.f32.mrf.mxu0
  %v636 = vadd.f32 0.0, %v635
  %637 = vmatmul.bf16.gmra.mxu0 %v114
  %v638 = vpop.f32.mrf.mxu0
  %v639 = vadd.f32 0.0, %v638
  %v640 = vpop.f32.mrf.mxu0
  %v641 = vadd.f32 0.0, %v640
  %642 = vmatmul.bf16.gmra.mxu0 %v117
  %v643 = vpop.f32.mrf.mxu0
  %v644 = vadd.f32 0.0, %v643
  %v645 = vpop.f32.mrf.mxu0
  %v646 = vadd.f32 0.0, %v645
  %647 = vdwg.mxu0
  %v648 = vsel %vm119, %v589, 0
  %650 = vmatpush.bf16.msra.mxu0 0
  %651 = vmatpush.bf16.msra.mxu0 0
  %652 = vmatpush.bf16.msra.mxu0 0
  %653 = vmatpush.bf16.msra.mxu0 0
  %654 = vmatpush.bf16.msra.mxu0 0
  %655 = vmatpush.bf16.msra.mxu0 0
  %656 = vmatpush.bf16.msra.mxu0 0
  %657 = vmatpush.bf16.msra.mxu0 %v648
  %658 = vmatmul.bf16.gmra.mxu0 %v213
  %v659 = vpop.f32.mrf.mxu0
  %v660 = vadd.f32 %v609, %v659
  %v661 = vpop.f32.mrf.mxu0
  %v662 = vadd.f32 %v611, %v661
  %663 = vmatmul.bf16.gmra.mxu0 %v216
  %v664 = vpop.f32.mrf.mxu0
  %v665 = vadd.f32 %v614, %v664
  %v666 = vpop.f32.mrf.mxu0
  %v667 = vadd.f32 %v616, %v666
  %668 = vmatmul.bf16.gmra.mxu0 %v219
  %v669 = vpop.f32.mrf.mxu0
  %v670 = vadd.f32 %v619, %v669
  %v671 = vpop.f32.mrf.mxu0
  %v672 = vadd.f32 %v621, %v671
  %673 = vmatmul.bf16.gmra.mxu0 %v222
  %v674 = vpop.f32.mrf.mxu0
  %v675 = vadd.f32 %v624, %v674
  %v676 = vpop.f32.mrf.mxu0
  %v677 = vadd.f32 %v626, %v676
  %678 = vmatmul.bf16.gmra.mxu0 %v225
  %v679 = vpop.f32.mrf.mxu0
  %v680 = vadd.f32 %v629, %v679
  %v681 = vpop.f32.mrf.mxu0
  %v682 = vadd.f32 %v631, %v681
  %683 = vmatmul.bf16.gmra.mxu0 %v228
  %v684 = vpop.f32.mrf.mxu0
  %v685 = vadd.f32 %v634, %v684
  %v686 = vpop.f32.mrf.mxu0
  %v687 = vadd.f32 %v636, %v686
  %688 = vmatmul.bf16.gmra.mxu0 %v231
  %v689 = vpop.f32.mrf.mxu0
  %v690 = vadd.f32 %v639, %v689
  %v691 = vpop.f32.mrf.mxu0
  %v692 = vadd.f32 %v641, %v691
  %693 = vmatmul.bf16.gmra.mxu0 %v234
  %v694 = vpop.f32.mrf.mxu0
  %v695 = vadd.f32 %v644, %v694
  %v696 = vpop.f32.mrf.mxu0
  %v697 = vadd.f32 %v646, %v696
  %698 = vdwg.mxu0
  %v699 = vld [vmem:[%s588] sm:$0x3]
  %701 = vst [vmem:[#allocation1] ss:$4 sm:$0xff] %v699
  %v702 = vld.sshfl [vmem:[#allocation1] sm:$0xff pattern:$0x73625140]
  %704 = vrot.lane.b32.xlu0 %v702, 126
  %v705 = vpop.permute.xlu0 %704
  %v707 = vsel %vm119, %v705, 0
  %709 = vmatpush.bf16.msra.mxu0 0
  %710 = vmatpush.bf16.msra.mxu0 0
  %711 = vmatpush.bf16.msra.mxu0 0
  %712 = vmatpush.bf16.msra.mxu0 0
  %713 = vmatpush.bf16.msra.mxu0 0
  %714 = vmatpush.bf16.msra.mxu0 0
  %715 = vmatpush.bf16.msra.mxu0 0
  %716 = vmatpush.bf16.msra.mxu0 %v707
  %717 = vmatmul.bf16.gmra.mxu0 %v352
  %v718 = vpop.f32.mrf.mxu0
  %v719 = vadd.f32 0.0, %v718
  %v720 = vpop.f32.mrf.mxu0
  %v721 = vadd.f32 0.0, %v720
  %722 = vmatmul.bf16.gmra.mxu0 %v355
  %v723 = vpop.f32.mrf.mxu0
  %v724 = vadd.f32 0.0, %v723
  %v725 = vpop.f32.mrf.mxu0
  %v726 = vadd.f32 0.0, %v725
  %727 = vmatmul.bf16.gmra.mxu0 %v358
  %v728 = vpop.f32.mrf.mxu0
  %v729 = vadd.f32 0.0, %v728
  %v730 = vpop.f32.mrf.mxu0
  %v731 = vadd.f32 0.0, %v730
  %732 = vmatmul.bf16.gmra.mxu0 %v361
  %v733 = vpop.f32.mrf.mxu0
  %v734 = vadd.f32 0.0, %v733
  %v735 = vpop.f32.mrf.mxu0
  %v736 = vadd.f32 0.0, %v735
  %737 = vmatmul.bf16.gmra.mxu0 %v364
  %v738 = vpop.f32.mrf.mxu0
  %v739 = vadd.f32 0.0, %v738
  %v740 = vpop.f32.mrf.mxu0
  %v741 = vadd.f32 0.0, %v740
  %742 = vmatmul.bf16.gmra.mxu0 %v367
  %v743 = vpop.f32.mrf.mxu0
  %v744 = vadd.f32 0.0, %v743
  %v745 = vpop.f32.mrf.mxu0
  %v746 = vadd.f32 0.0, %v745
  %747 = vmatmul.bf16.gmra.mxu0 %v370
  %v748 = vpop.f32.mrf.mxu0
  %v749 = vadd.f32 0.0, %v748
  %v750 = vpop.f32.mrf.mxu0
  %v751 = vadd.f32 0.0, %v750
  %752 = vmatmul.bf16.gmra.mxu0 %v373
  %v753 = vpop.f32.mrf.mxu0
  %v754 = vadd.f32 0.0, %v753
  %v755 = vpop.f32.mrf.mxu0
  %v756 = vadd.f32 0.0, %v755
  %757 = vdwg.mxu0
  %v758 = vadd.f32 %v660, %v719
  %v759 = vadd.f32 %v662, %v721
  %v760 = vadd.f32 %v665, %v724
  %v761 = vadd.f32 %v667, %v726
  %v762 = vadd.f32 %v670, %v729
  %v763 = vadd.f32 %v672, %v731
  %v764 = vadd.f32 %v675, %v734
  %v765 = vadd.f32 %v677, %v736
  %v766 = vadd.f32 %v680, %v739
  %v767 = vadd.f32 %v682, %v741
  %v768 = vadd.f32 %v685, %v744
  %v769 = vadd.f32 %v687, %v746
  %v770 = vadd.f32 %v690, %v749
  %v771 = vadd.f32 %v692, %v751
  %v772 = vadd.f32 %v695, %v754
  %v773 = vadd.f32 %v697, %v756
  %v774 = vsel %vm443, %v758, 0.0
  %775 = vadd.xlane.f32.xlu0 %v774
  %v776 = vpop.xlane.xlu0 %775
  %v777 = vsel %vm443, %v759, 0.0
  %778 = vadd.xlane.f32.xlu0 %v777
  %v779 = vpop.xlane.xlu0 %778
  %v780 = vsel %vm443, %v760, 0.0
  %781 = vadd.xlane.f32.xlu0 %v780
  %v782 = vpop.xlane.xlu0 %781
  %v783 = vsel %vm443, %v761, 0.0
  %784 = vadd.xlane.f32.xlu0 %v783
  %v785 = vpop.xlane.xlu0 %784
  %v786 = vsel %vm443, %v762, 0.0
  %787 = vadd.xlane.f32.xlu0 %v786
  %v788 = vpop.xlane.xlu0 %787
  %v789 = vsel %vm443, %v763, 0.0
  %790 = vadd.xlane.f32.xlu0 %v789
  %v791 = vpop.xlane.xlu0 %790
  %v792 = vsel %vm443, %v764, 0.0
  %793 = vadd.xlane.f32.xlu0 %v792
  %v794 = vpop.xlane.xlu0 %793
  %v795 = vsel %vm443, %v765, 0.0
  %796 = vadd.xlane.f32.xlu0 %v795
  %v797 = vpop.xlane.xlu0 %796
  %v798 = vsel %vm443, %v766, 0.0
  %799 = vadd.xlane.f32.xlu0 %v798
  %v800 = vpop.xlane.xlu0 %799
  %v801 = vsel %vm443, %v767, 0.0
  %802 = vadd.xlane.f32.xlu0 %v801
  %v803 = vpop.xlane.xlu0 %802
  %v804 = vsel %vm443, %v768, 0.0
  %805 = vadd.xlane.f32.xlu0 %v804
  %v806 = vpop.xlane.xlu0 %805
  %v807 = vsel %vm443, %v769, 0.0
  %808 = vadd.xlane.f32.xlu0 %v807
  %v809 = vpop.xlane.xlu0 %808
  %v810 = vsel %vm443, %v770, 0.0
  %811 = vadd.xlane.f32.xlu0 %v810
  %v812 = vpop.xlane.xlu0 %811
  %v813 = vsel %vm443, %v771, 0.0
  %814 = vadd.xlane.f32.xlu0 %v813
  %v815 = vpop.xlane.xlu0 %814
  %v816 = vsel %vm443, %v772, 0.0
  %817 = vadd.xlane.f32.xlu0 %v816
  %v818 = vpop.xlane.xlu0 %817
  %v819 = vsel %vm443, %v773, 0.0
  %820 = vadd.xlane.f32.xlu0 %v819
  %v821 = vpop.xlane.xlu0 %820
  %v822 = vadd.f32 %v492, %v776
  %v823 = vadd.f32 %v493, %v779
  %v824 = vadd.f32 %v494, %v782
  %v825 = vadd.f32 %v495, %v785
  %v826 = vadd.f32 %v496, %v788
  %v827 = vadd.f32 %v497, %v791
  %v828 = vadd.f32 %v498, %v794
  %v829 = vadd.f32 %v499, %v797
  %v830 = vadd.f32 %v500, %v800
  %v831 = vadd.f32 %v501, %v803
  %v832 = vadd.f32 %v502, %v806
  %v833 = vadd.f32 %v503, %v809
  %v834 = vadd.f32 %v504, %v812
  %v835 = vadd.f32 %v505, %v815
  %v836 = vadd.f32 %v506, %v818
  %v837 = vadd.f32 %v507, %v821
  %v838 = vmul.f32 %v758, %v758
  %v839 = vmul.f32 %v759, %v759
  %v840 = vmul.f32 %v760, %v760
  %v841 = vmul.f32 %v761, %v761
  %v842 = vmul.f32 %v762, %v762
  %v843 = vmul.f32 %v763, %v763
  %v844 = vmul.f32 %v764, %v764
  %v845 = vmul.f32 %v765, %v765
  %v846 = vmul.f32 %v766, %v766
  %v847 = vmul.f32 %v767, %v767
  %v848 = vmul.f32 %v768, %v768
  %v849 = vmul.f32 %v769, %v769
  %v850 = vmul.f32 %v770, %v770
  %v851 = vmul.f32 %v771, %v771
  %v852 = vmul.f32 %v772, %v772
  %v853 = vmul.f32 %v773, %v773
  %v854 = vsel %vm443, %v838, 0.0
  %855 = vadd.xlane.f32.xlu0 %v854
  %v856 = vpop.xlane.xlu0 %855
  %v857 = vsel %vm443, %v839, 0.0
  %858 = vadd.xlane.f32.xlu0 %v857
  %v859 = vpop.xlane.xlu0 %858
  %v860 = vsel %vm443, %v840, 0.0
  %861 = vadd.xlane.f32.xlu0 %v860
  %v862 = vpop.xlane.xlu0 %861
  %v863 = vsel %vm443, %v841, 0.0
  %864 = vadd.xlane.f32.xlu0 %v863
  %v865 = vpop.xlane.xlu0 %864
  %v866 = vsel %vm443, %v842, 0.0
  %867 = vadd.xlane.f32.xlu0 %v866
  %v868 = vpop.xlane.xlu0 %867
  %v869 = vsel %vm443, %v843, 0.0
  %870 = vadd.xlane.f32.xlu0 %v869
  %v871 = vpop.xlane.xlu0 %870
  %v872 = vsel %vm443, %v844, 0.0
  %873 = vadd.xlane.f32.xlu0 %v872
  %v874 = vpop.xlane.xlu0 %873
  %v875 = vsel %vm443, %v845, 0.0
  %876 = vadd.xlane.f32.xlu0 %v875
  %v877 = vpop.xlane.xlu0 %876
  %v878 = vsel %vm443, %v846, 0.0
  %879 = vadd.xlane.f32.xlu0 %v878
  %v880 = vpop.xlane.xlu0 %879
  %v881 = vsel %vm443, %v847, 0.0
  %882 = vadd.xlane.f32.xlu0 %v881
  %v883 = vpop.xlane.xlu0 %882
  %v884 = vsel %vm443, %v848, 0.0
  %885 = vadd.xlane.f32.xlu0 %v884
  %v886 = vpop.xlane.xlu0 %885
  %v887 = vsel %vm443, %v849, 0.0
  %888 = vadd.xlane.f32.xlu0 %v887
  %v889 = vpop.xlane.xlu0 %888
  %v890 = vsel %vm443, %v850, 0.0
  %891 = vadd.xlane.f32.xlu0 %v890
  %v892 = vpop.xlane.xlu0 %891
  %v893 = vsel %vm443, %v851, 0.0
  %894 = vadd.xlane.f32.xlu0 %v893
  %v895 = vpop.xlane.xlu0 %894
  %v896 = vsel %vm443, %v852, 0.0
  %897 = vadd.xlane.f32.xlu0 %v896
  %v898 = vpop.xlane.xlu0 %897
  %v899 = vsel %vm443, %v853, 0.0
  %900 = vadd.xlane.f32.xlu0 %v899
  %v901 = vpop.xlane.xlu0 %900
  %v902 = vadd.f32 %v572, %v856
  %v903 = vadd.f32 %v573, %v859
  %v904 = vadd.f32 %v574, %v862
  %v905 = vadd.f32 %v575, %v865
  %v906 = vadd.f32 %v576, %v868
  %v907 = vadd.f32 %v577, %v871
  %v908 = vadd.f32 %v578, %v874
  %v909 = vadd.f32 %v579, %v877
  %v910 = vadd.f32 %v580, %v880
  %v911 = vadd.f32 %v581, %v883
  %v912 = vadd.f32 %v582, %v886
  %v913 = vadd.f32 %v583, %v889
  %v914 = vadd.f32 %v584, %v892
  %v915 = vadd.f32 %v585, %v895
  %v916 = vadd.f32 %v586, %v898
  %v917 = vadd.f32 %v587, %v901
  %vm918 = vcmask 7168
  %919 = vst.msk [vmem:[%s2] sm:$0xff] %vm918, %v822
  %920 = vst.msk [vmem:[%s2 + $0x8] sm:$0xff] %vm918, %v823
  %921 = vst.msk [vmem:[%s2 + $0x10] sm:$0xff] %vm918, %v824
  %922 = vst.msk [vmem:[%s2 + $0x18] sm:$0xff] %vm918, %v825
  %923 = vst.msk [vmem:[%s2 + $0x20] sm:$0xff] %vm918, %v826
  %924 = vst.msk [vmem:[%s2 + $0x28] sm:$0xff] %vm918, %v827
  %925 = vst.msk [vmem:[%s2 + $0x30] sm:$0xff] %vm918, %v828
  %926 = vst.msk [vmem:[%s2 + $0x38] sm:$0xff] %vm918, %v829
  %927 = vst.msk [vmem:[%s2 + $0x40] sm:$0xff] %vm918, %v830
  %928 = vst.msk [vmem:[%s2 + $0x48] sm:$0xff] %vm918, %v831
  %929 = vst.msk [vmem:[%s2 + $0x50] sm:$0xff] %vm918, %v832
  %930 = vst.msk [vmem:[%s2 + $0x58] sm:$0xff] %vm918, %v833
  %931 = vst.msk [vmem:[%s2 + $0x60] sm:$0xff] %vm918, %v834
  %932 = vst.msk [vmem:[%s2 + $0x68] sm:$0xff] %vm918, %v835
  %933 = vst.msk [vmem:[%s2 + $0x70] sm:$0xff] %vm918, %v836
  %934 = vst.msk [vmem:[%s2 + $0x78] sm:$0xff] %vm918, %v837
  %935 = vst.msk [vmem:[%s3] sm:$0xff] %vm918, %v902
  %936 = vst.msk [vmem:[%s3 + $0x8] sm:$0xff] %vm918, %v903
  %937 = vst.msk [vmem:[%s3 + $0x10] sm:$0xff] %vm918, %v904
  %938 = vst.msk [vmem:[%s3 + $0x18] sm:$0xff] %vm918, %v905
  %939 = vst.msk [vmem:[%s3 + $0x20] sm:$0xff] %vm918, %v906
  %940 = vst.msk [vmem:[%s3 + $0x28] sm:$0xff] %vm918, %v907
  %941 = vst.msk [vmem:[%s3 + $0x30] sm:$0xff] %vm918, %v908
  %942 = vst.msk [vmem:[%s3 + $0x38] sm:$0xff] %vm918, %v909
  %943 = vst.msk [vmem:[%s3 + $0x40] sm:$0xff] %vm918, %v910
  %944 = vst.msk [vmem:[%s3 + $0x48] sm:$0xff] %vm918, %v911
  %945 = vst.msk [vmem:[%s3 + $0x50] sm:$0xff] %vm918, %v912
  %946 = vst.msk [vmem:[%s3 + $0x58] sm:$0xff] %vm918, %v913
  %947 = vst.msk [vmem:[%s3 + $0x60] sm:$0xff] %vm918, %v914
  %948 = vst.msk [vmem:[%s3 + $0x68] sm:$0xff] %vm918, %v915
  %949 = vst.msk [vmem:[%s3 + $0x70] sm:$0xff] %vm918, %v916
  %950 = vst.msk [vmem:[%s3 + $0x78] sm:$0xff] %vm918, %v917
  // Predicated region
  $region10: #{tpu_custom_call.1} parent=0 // pred_check
    _
  $region11: #{tpu_custom_call.1} parent=0 // pred_check_branch
    %952 = sbr.rel (0) target = $region13
  $region12: #{tpu_custom_call.1} parent=0 // pred_region
    _
  $region13: #{tpu_custom_call.1} parent=0 // pred_fallthru
    _
  // Predicated region
  $region14: #{tpu_custom_call.1} parent=0 // pred_check
    _
  $region15: #{tpu_custom_call.1} parent=0 // pred_check_branch
    %954 = sbr.rel (0) target = $region17
  $region16: #{tpu_custom_call.1} parent=0 // pred_region
    _
  $region17: #{tpu_custom_call.1} parent=0 // pred_fallthru
    _
  // Predicated region
  $region18: #{tpu_custom_call.1} parent=0 // pred_check
    _
  $region19: #{tpu_custom_call.1} parent=0 // pred_check_branch
    %956 = sbr.rel (0) target = $region21
  $region20: #{tpu_custom_call.1} parent=0 // pred_region
    _
  $region21: #{tpu_custom_call.1} parent=0 // pred_fallthru
    _
  // Predicated region
  $region22: #{tpu_custom_call.1} parent=0 // pred_check
    _
  $region23: #{tpu_custom_call.1} parent=0 // pred_check_branch
    %958 = sbr.rel (0) target = $region25
  $region24: #{tpu_custom_call.1} parent=0 // pred_region
    _
  $region25: #{tpu_custom_call.1} parent=0 // pred_fallthru
    _

</llo_original>
